<compile_context>
chip_gen: v7x
topology: tpu7x:2x2x1
jax: 0.10.0
libtpu: 0.0.40
codegen_flags: <defaults>
</compile_context>

<pallas_src>
import functools

import jax
import jax.numpy as jnp
from jax.experimental import pallas as pl
from jax.experimental.pallas import tpu as pltpu


def _dice_sums_kernel(x_ref, t_ref, inter_ref, ysum_ref, zsum_ref,
                      acc_i, acc_y, acc_z, *, fuse_softmax, mask_invalid):
    s = pl.program_id(1)

    @pl.when(s == 0)
    def _init():
        acc_i[...] = jnp.zeros_like(acc_i)
        acc_y[...] = jnp.zeros_like(acc_y)
        acc_z[...] = jnp.zeros_like(acc_z)

    score = x_ref[0].astype(jnp.float32)              # (C, TILE), classes on sublanes
    if fuse_softmax:
        # All C logits for this spatial tile are resident: fused softmax over
        # the class (sublane) axis.  exp() runs on the EUP slot.
        score = score - jnp.max(score, axis=0, keepdims=True)
        score = jnp.exp(score)
        score = score / jnp.sum(score, axis=0, keepdims=True)

    labels = t_ref[0].astype(jnp.int32)               # (1, TILE)
    cls = jax.lax.broadcasted_iota(jnp.int32, score.shape, 0)
    mask = labels == cls                              # (C, TILE) one-hot mask

    acc_i[...] += jnp.where(mask, score, 0.0)         # sum(score * onehot)
    acc_y[...] += mask.astype(jnp.float32)            # sum(onehot * onehot) == count
    sq = score * score
    if mask_invalid:
        # Only needed when the spatial axis was padded AND softmax is fused
        # (padded logits softmax to 1/C, not 0): drop padded lanes from z_sum.
        sq = jnp.where(labels < score.shape[0], sq, 0.0)
    acc_z[...] += sq                                  # sum(score * score)

    @pl.when(s == pl.num_programs(1) - 1)
    def _finalize():
        # Single cross-lane reduce per output, once per batch element.
        inter_ref[0] = jnp.sum(acc_i[...], axis=-1, keepdims=True)
        ysum_ref[0] = jnp.sum(acc_y[...], axis=-1, keepdims=True)
        zsum_ref[0] = jnp.sum(acc_z[...], axis=-1, keepdims=True)


def _choose_spatial_tile(S, C, vmem_budget_bytes=6 << 20):
    """Pick the lane tile for the flattened spatial axis.

    Returns (tile, padded_S).  Resident bytes per lane: double-buffered input
    block (2*C*4) + double-buffered label tile (2*4) + 3 f32 accumulators
    (3*C*4).  Prefer the largest 128-multiple divisor of S within budget (no
    padding); if the whole extent fits, take one block; otherwise pad S up to
    a multiple of a budget-sized tile.
    """
    per_lane = (5 * C + 2) * 4
    max_lanes = max(128, vmem_budget_bytes // per_lane)
    if S <= max_lanes:
        return S, S                     # full-extent block (always legal)
    target = max_lanes - (max_lanes % 128)
    cand = target
    while cand >= 128:
        if S % cand == 0:
            return cand, S              # exact divisor, no padding
        cand -= 128
    tile = max(target, 128)             # ragged: pad up to a tile multiple
    return tile, ((S + tile - 1) // tile) * tile


def dice_loss(inputs, target, n_classes, weight=None, softmax=False):
    """Matches DiceLoss.forward.

    inputs: (B, C, H, W) float (probabilities, or logits if softmax=True)
    target: (B, H, W) integer class labels in [0, n_classes)
    """
    B, C, H, W = inputs.shape
    assert C == n_classes, "predict & target shape do not match"
    S = H * W

    # Free relayouts only (no transpose): NCHW -> (B, C, S); labels -> (B, 1, S).
    x = inputs.reshape(B, C, S)
    t = target.reshape(B, 1, S).astype(jnp.int32)

    tile, S_pad = _choose_spatial_tile(S, C)
    pad = S_pad - S
    if pad:
        # Padded scores are 0 (contribute 0 to every sum); padded labels use
        # the sentinel n_classes so the one-hot mask never fires on them.
        x = jnp.pad(x, ((0, 0), (0, 0), (0, pad)))
        t = jnp.pad(t, ((0, 0), (0, 0), (0, pad)), constant_values=n_classes)
    s_tiles = S_pad // tile
    mask_invalid = bool(softmax) and pad > 0

    # VMEM budget: double-buffered input blocks + accumulators + tiny outputs.
    elt = jnp.dtype(x.dtype).itemsize
    vmem_est = (2 * (C * tile * elt + tile * 4)
                + 3 * C * tile * 4
                + 2 * 3 * C * 4)
    vmem_limit = int(min(max(4 * vmem_est, 8 << 20), 48 << 20))

    kernel = functools.partial(_dice_sums_kernel,
                               fuse_softmax=bool(softmax),
                               mask_invalid=mask_invalid)

    inter, ysum, zsum = pl.pallas_call(
        kernel,
        out_shape=(
            jax.ShapeDtypeStruct((B, C, 1), jnp.float32),
            jax.ShapeDtypeStruct((B, C, 1), jnp.float32),
            jax.ShapeDtypeStruct((B, C, 1), jnp.float32),
        ),
        grid_spec=pltpu.PrefetchScalarGridSpec(
            num_scalar_prefetch=0,
            grid=(B, s_tiles),
            in_specs=[
                pl.BlockSpec((1, C, tile), lambda b, s: (b, 0, s)),   # class slab
                pl.BlockSpec((1, 1, tile), lambda b, s: (b, 0, s)),   # label tile
            ],
            out_specs=[
                pl.BlockSpec((1, C, 1), lambda b, s: (b, 0, 0)),
                pl.BlockSpec((1, C, 1), lambda b, s: (b, 0, 0)),
                pl.BlockSpec((1, C, 1), lambda b, s: (b, 0, 0)),
            ],
            scratch_shapes=[
                pltpu.VMEM((C, tile), jnp.float32),
                pltpu.VMEM((C, tile), jnp.float32),
                pltpu.VMEM((C, tile), jnp.float32),
            ],
        ),
        compiler_params=pltpu.CompilerParams(
            dimension_semantics=("parallel", "arbitrary"),
            vmem_limit_bytes=vmem_limit,
        ),
    )(x, t)

    # Scalar glue (O(B*C)): combine per-(batch, class) partial sums.
    inter = jnp.sum(inter[:, :, 0], axis=0)
    ysum = jnp.sum(ysum[:, :, 0], axis=0)
    zsum = jnp.sum(zsum[:, :, 0], axis=0)

    smooth = 1e-5
    dice = 1.0 - (2.0 * inter + smooth) / (zsum + ysum + smooth)   # per-class loss
    if weight is None:
        weight = jnp.ones((C,), jnp.float32)
    else:
        weight = jnp.asarray(weight, jnp.float32)
    return jnp.sum(dice * weight) / n_classes


def _ref_dice_loss(inputs, target, n_classes, weight=None, softmax=False):
    """Pure-JAX mirror of the PyTorch module (for testing)."""
    if softmax:
        inputs = jax.nn.softmax(inputs, axis=1)
    onehot = jnp.transpose(jax.nn.one_hot(target, n_classes, dtype=jnp.float32),
                           (0, 3, 1, 2))
    if weight is None:
        weight = [1.0] * n_classes
    smooth = 1e-5
    loss = 0.0
    for i in range(n_classes):
        s, t = inputs[:, i], onehot[:, i]
        inter = jnp.sum(s * t)
        y = jnp.sum(t * t)
        z = jnp.sum(s * s)
        loss = loss + (1.0 - (2.0 * inter + smooth) / (z + y + smooth)) * weight[i]
    return loss / n_classes


if __name__ == "__main__":
    key = jax.random.PRNGKey(0)
    B, C, H, W = 2, 4, 16, 16
    k1, k2 = jax.random.split(key)

    logits = jax.random.normal(k1, (B, C, H, W), jnp.float32)
    probs = jax.nn.softmax(logits, axis=1)
    target = jax.random.randint(k2, (B, H, W), 0, C, jnp.int32)

    # Path 1: precomputed probabilities (softmax=False).
    loss = jax.block_until_ready(dice_loss(probs, target, n_classes=C, softmax=False))
    ref = _ref_dice_loss(probs, target, C, softmax=False)
    assert jnp.allclose(loss, ref, atol=1e-5), (float(loss), float(ref))

    # Path 2: fused in-kernel softmax (softmax=True).
    loss_sm = jax.block_until_ready(dice_loss(logits, target, n_classes=C, softmax=True))
    ref_sm = _ref_dice_loss(logits, target, C, softmax=True)
    assert jnp.allclose(loss_sm, ref_sm, atol=1e-5), (float(loss_sm), float(ref_sm))

    # Path 3: class weights.
    w = [0.5, 1.0, 2.0, 0.25]
    loss_w = jax.block_until_ready(dice_loss(probs, target, n_classes=C, weight=w))
    ref_w = _ref_dice_loss(probs, target, C, weight=w)
    assert jnp.allclose(loss_w, ref_w, atol=1e-5), (float(loss_w), float(ref_w))

    print("KERNEL_OK")
</pallas_src>

<mosaic_0001>
module attributes {stable_mosaic.version = 11 : i64} {
  func.func @_dice_sums_kernel(%arg0: i32, %arg1: i32, %arg2: memref<1x4x256xf32, #tpu.memory_space<vmem>>, %arg3: memref<1x1x256xi32, #tpu.memory_space<vmem>>, %arg4: memref<1x4x1xf32, #tpu.memory_space<vmem>>, %arg5: memref<1x4x1xf32, #tpu.memory_space<vmem>>, %arg6: memref<1x4x1xf32, #tpu.memory_space<vmem>>, %arg7: memref<4x256xf32, #tpu.memory_space<vmem>>, %arg8: memref<4x256xf32, #tpu.memory_space<vmem>>, %arg9: memref<4x256xf32, #tpu.memory_space<vmem>>) attributes {dimension_semantics = [#tpu.dimension_semantics<parallel>, #tpu.dimension_semantics<arbitrary>], iteration_bounds = array<i64: 2, 1>, scalar_prefetch = 0 : i64, scratch_operands = 3 : i64, tpu.core_type = #tpu.core_type<tc>, window_params = [{transform_indices = @transform_0, window_bounds = array<i64: 1, 4, 256>}, {transform_indices = @transform_1, window_bounds = array<i64: 1, 1, 256>}, {transform_indices = @transform_2, window_bounds = array<i64: 1, 4, 1>}, {transform_indices = @transform_3, window_bounds = array<i64: 1, 4, 1>}, {transform_indices = @transform_4, window_bounds = array<i64: 1, 4, 1>}]} {
    %c0_i32 = arith.constant 0 : i32
    %0 = arith.cmpi eq, %arg1, %c0_i32 : i32
    %1 = arith.extui %0 : i1 to i32
    %c0_i32_0 = arith.constant 0 : i32
    %2 = arith.cmpi ne, %1, %c0_i32_0 : i32
    scf.if %2 {
      %cst_20 = arith.constant 0.000000e+00 : f32
      %27 = vector.broadcast %cst_20 : f32 to vector<4x256xf32>
      %c0_21 = arith.constant 0 : index
      %c0_22 = arith.constant 0 : index
      %28 = vector.load %arg7[%c0_21, %c0_22] : memref<4x256xf32, #tpu.memory_space<vmem>>, vector<4x256xf32>
      tpu.vector_store %arg7[%c0_21, %c0_22], %27 {strides = array<i32>} : memref<4x256xf32, #tpu.memory_space<vmem>>, vector<4x256xf32>,
      %cst_23 = arith.constant 0.000000e+00 : f32
      %29 = vector.broadcast %cst_23 : f32 to vector<4x256xf32>
      %c0_24 = arith.constant 0 : index
      %c0_25 = arith.constant 0 : index
      %30 = vector.load %arg8[%c0_24, %c0_25] : memref<4x256xf32, #tpu.memory_space<vmem>>, vector<4x256xf32>
      tpu.vector_store %arg8[%c0_24, %c0_25], %29 {strides = array<i32>} : memref<4x256xf32, #tpu.memory_space<vmem>>, vector<4x256xf32>,
      %cst_26 = arith.constant 0.000000e+00 : f32
      %31 = vector.broadcast %cst_26 : f32 to vector<4x256xf32>
      %c0_27 = arith.constant 0 : index
      %c0_28 = arith.constant 0 : index
      %32 = vector.load %arg9[%c0_27, %c0_28] : memref<4x256xf32, #tpu.memory_space<vmem>>, vector<4x256xf32>
      tpu.vector_store %arg9[%c0_27, %c0_28], %31 {strides = array<i32>} : memref<4x256xf32, #tpu.memory_space<vmem>>, vector<4x256xf32>,
    } else {
    }
    %c0 = arith.constant 0 : index
    %c0_1 = arith.constant 0 : index
    %c0_2 = arith.constant 0 : index
    %3 = vector.load %arg2[%c0, %c0_1, %c0_2] : memref<1x4x256xf32, #tpu.memory_space<vmem>>, vector<1x4x256xf32>
    %4 = vector.shape_cast %3 : vector<1x4x256xf32> to vector<4x256xf32>
    %c0_3 = arith.constant 0 : index
    %c0_4 = arith.constant 0 : index
    %c0_5 = arith.constant 0 : index
    %5 = vector.load %arg3[%c0_3, %c0_4, %c0_5] : memref<1x1x256xi32, #tpu.memory_space<vmem>>, vector<1x1x256xi32>
    %6 = vector.shape_cast %5 : vector<1x1x256xi32> to vector<1x256xi32>
    %7 = tpu.iota {dimensions = array<i32: 0>} : vector<4x256xi32>
    %8 = vector.broadcast %6 : vector<1x256xi32> to vector<4x256xi32>
    %9 = arith.cmpi eq, %8, %7 : vector<4x256xi32>
    %c0_6 = arith.constant 0 : index
    %c0_7 = arith.constant 0 : index
    %10 = vector.load %arg7[%c0_6, %c0_7] : memref<4x256xf32, #tpu.memory_space<vmem>>, vector<4x256xf32>
    %cst = arith.constant 0.000000e+00 : f32
    %11 = vector.broadcast %cst : f32 to vector<4x256xf32>
    %12 = arith.select %9, %4, %11 : vector<4x256xi1>, vector<4x256xf32>
    %13 = arith.addf %10, %12 : vector<4x256xf32>
    %c0_8 = arith.constant 0 : index
    %c0_9 = arith.constant 0 : index
    %14 = vector.load %arg7[%c0_8, %c0_9] : memref<4x256xf32, #tpu.memory_space<vmem>>, vector<4x256xf32>
    tpu.vector_store %arg7[%c0_8, %c0_9], %13 {strides = array<i32>} : memref<4x256xf32, #tpu.memory_space<vmem>>, vector<4x256xf32>,
    %c0_10 = arith.constant 0 : index
    %c0_11 = arith.constant 0 : index
    %15 = vector.load %arg8[%c0_10, %c0_11] : memref<4x256xf32, #tpu.memory_space<vmem>>, vector<4x256xf32>
    %16 = arith.extui %9 : vector<4x256xi1> to vector<4x256xi32>
    %17 = arith.sitofp %16 : vector<4x256xi32> to vector<4x256xf32>
    %18 = arith.addf %15, %17 : vector<4x256xf32>
    %c0_12 = arith.constant 0 : index
    %c0_13 = arith.constant 0 : index
    %19 = vector.load %arg8[%c0_12, %c0_13] : memref<4x256xf32, #tpu.memory_space<vmem>>, vector<4x256xf32>
    tpu.vector_store %arg8[%c0_12, %c0_13], %18 {strides = array<i32>} : memref<4x256xf32, #tpu.memory_space<vmem>>, vector<4x256xf32>,
    %20 = arith.mulf %4, %4 : vector<4x256xf32>
    %c0_14 = arith.constant 0 : index
    %c0_15 = arith.constant 0 : index
    %21 = vector.load %arg9[%c0_14, %c0_15] : memref<4x256xf32, #tpu.memory_space<vmem>>, vector<4x256xf32>
    %22 = arith.addf %21, %20 : vector<4x256xf32>
    %c0_16 = arith.constant 0 : index
    %c0_17 = arith.constant 0 : index
    %23 = vector.load %arg9[%c0_16, %c0_17] : memref<4x256xf32, #tpu.memory_space<vmem>>, vector<4x256xf32>
    tpu.vector_store %arg9[%c0_16, %c0_17], %22 {strides = array<i32>} : memref<4x256xf32, #tpu.memory_space<vmem>>, vector<4x256xf32>,
    %c0_i32_18 = arith.constant 0 : i32
    %24 = arith.cmpi eq, %arg1, %c0_i32_18 : i32
    %25 = arith.extui %24 : i1 to i32
    %c0_i32_19 = arith.constant 0 : i32
    %26 = arith.cmpi ne, %25, %c0_i32_19 : i32
    scf.if %26 {
      %c0_20 = arith.constant 0 : index
      %c0_21 = arith.constant 0 : index
      %27 = vector.load %arg7[%c0_20, %c0_21] : memref<4x256xf32, #tpu.memory_space<vmem>>, vector<4x256xf32>
      %cst_22 = arith.constant dense<0.000000e+00> : vector<4xf32>
      %28 = vector.multi_reduction <add>, %27, %cst_22 [1] : vector<4x256xf32> to vector<4xf32>
      %29 = vector.shape_cast %28 : vector<4xf32> to vector<4x1xf32>
      %c0_23 = arith.constant 0 : index
      %c0_24 = arith.constant 0 : index
      %c0_25 = arith.constant 0 : index
      %30 = vector.load %arg4[%c0_23, %c0_24, %c0_25] : memref<1x4x1xf32, #tpu.memory_space<vmem>>, vector<1x4x1xf32>
      %31 = vector.shape_cast %30 : vector<1x4x1xf32> to vector<4x1xf32>
      %32 = vector.shape_cast %29 : vector<4x1xf32> to vector<1x4x1xf32>
      tpu.vector_store %arg4[%c0_23, %c0_24, %c0_25], %32 {strides = array<i32>} : memref<1x4x1xf32, #tpu.memory_space<vmem>>, vector<1x4x1xf32>,
      %c0_26 = arith.constant 0 : index
      %c0_27 = arith.constant 0 : index
      %33 = vector.load %arg8[%c0_26, %c0_27] : memref<4x256xf32, #tpu.memory_space<vmem>>, vector<4x256xf32>
      %cst_28 = arith.constant dense<0.000000e+00> : vector<4xf32>
      %34 = vector.multi_reduction <add>, %33, %cst_28 [1] : vector<4x256xf32> to vector<4xf32>
      %35 = vector.shape_cast %34 : vector<4xf32> to vector<4x1xf32>
      %c0_29 = arith.constant 0 : index
      %c0_30 = arith.constant 0 : index
      %c0_31 = arith.constant 0 : index
      %36 = vector.load %arg5[%c0_29, %c0_30, %c0_31] : memref<1x4x1xf32, #tpu.memory_space<vmem>>, vector<1x4x1xf32>
      %37 = vector.shape_cast %36 : vector<1x4x1xf32> to vector<4x1xf32>
      %38 = vector.shape_cast %35 : vector<4x1xf32> to vector<1x4x1xf32>
      tpu.vector_store %arg5[%c0_29, %c0_30, %c0_31], %38 {strides = array<i32>} : memref<1x4x1xf32, #tpu.memory_space<vmem>>, vector<1x4x1xf32>,
      %c0_32 = arith.constant 0 : index
      %c0_33 = arith.constant 0 : index
      %39 = vector.load %arg9[%c0_32, %c0_33] : memref<4x256xf32, #tpu.memory_space<vmem>>, vector<4x256xf32>
      %cst_34 = arith.constant dense<0.000000e+00> : vector<4xf32>
      %40 = vector.multi_reduction <add>, %39, %cst_34 [1] : vector<4x256xf32> to vector<4xf32>
      %41 = vector.shape_cast %40 : vector<4xf32> to vector<4x1xf32>
      %c0_35 = arith.constant 0 : index
      %c0_36 = arith.constant 0 : index
      %c0_37 = arith.constant 0 : index
      %42 = vector.load %arg6[%c0_35, %c0_36, %c0_37] : memref<1x4x1xf32, #tpu.memory_space<vmem>>, vector<1x4x1xf32>
      %43 = vector.shape_cast %42 : vector<1x4x1xf32> to vector<4x1xf32>
      %44 = vector.shape_cast %41 : vector<4x1xf32> to vector<1x4x1xf32>
      tpu.vector_store %arg6[%c0_35, %c0_36, %c0_37], %44 {strides = array<i32>} : memref<1x4x1xf32, #tpu.memory_space<vmem>>, vector<1x4x1xf32>,
    } else {
    }
    return
  }
  func.func @transform_0(%arg0: i32, %arg1: i32) -> (i32, i32, i32) {
    %c0_i32 = arith.constant 0 : i32
    %c0_i32_0 = arith.constant 0 : i32
    return %arg0, %c0_i32, %arg1 : i32, i32, i32
  }
  func.func @transform_1(%arg0: i32, %arg1: i32) -> (i32, i32, i32) {
    %c0_i32 = arith.constant 0 : i32
    %c0_i32_0 = arith.constant 0 : i32
    return %arg0, %c0_i32, %arg1 : i32, i32, i32
  }
  func.func @transform_2(%arg0: i32, %arg1: i32) -> (i32, i32, i32) {
    %c0_i32 = arith.constant 0 : i32
    %c0_i32_0 = arith.constant 0 : i32
    %c0_i32_1 = arith.constant 0 : i32
    return %arg0, %c0_i32, %c0_i32_0 : i32, i32, i32
  }
  func.func @transform_3(%arg0: i32, %arg1: i32) -> (i32, i32, i32) {
    %c0_i32 = arith.constant 0 : i32
    %c0_i32_0 = arith.constant 0 : i32
    %c0_i32_1 = arith.constant 0 : i32
    return %arg0, %c0_i32, %c0_i32_0 : i32, i32, i32
  }
  func.func @transform_4(%arg0: i32, %arg1: i32) -> (i32, i32, i32) {
    %c0_i32 = arith.constant 0 : i32
    %c0_i32_0 = arith.constant 0 : i32
    %c0_i32_1 = arith.constant 0 : i32
    return %arg0, %c0_i32, %c0_i32_0 : i32, i32, i32
  }
}

</mosaic_0001>

<llo_original>
// kernel: tpu_custom_call.1
$region0: #{tpu_custom_call.1}
  #allocation0 [shape = 'u32[]', space=smem, size = 0x4, offset = 0x4, fixed_abs, tag = 'smem constant byte address 0x4 - core index']
  #allocation1 [shape = 'u32[144,128]{1,0:T(1,128)}', space=vmem, size = 0x12000, scoped, tag = 'internal scratch']
  #allocation2 [shape = 'f32[4,256]{1,0:T(4,128)}', space=vmem, size = 0x1000, scoped, tag = 'scratch operand']
  #allocation3 [shape = 'f32[4,256]{1,0:T(4,128)}', space=vmem, size = 0x1000, scoped, tag = 'scratch operand']
  #allocation4 [shape = 'f32[4,256]{1,0:T(4,128)}', space=vmem, size = 0x1000, scoped, tag = 'scratch operand']
  %s0 = inlined_call_operand.hbm [shape: f32[2,4,256], index: 0, kind: input, shape index: {}]
  %s1 = inlined_call_operand.hbm [shape: s32[2,1,256], index: 1, kind: input, shape index: {}]
  %s2 = inlined_call_operand.vmem [shape: f32[2,4,1], index: 2, kind: output, shape index: {0}]
  %s3 = inlined_call_operand.vmem [shape: f32[2,4,1], index: 3, kind: output, shape index: {1}]
  %s4 = inlined_call_operand.vmem [shape: f32[2,4,1], index: 4, kind: output, shape index: {2}]
  %5 = xla_tuple %s2, %s3, %s4
  %s6 = sld [smem:[#allocation0]]
  $region73: #{tpu_custom_call.1} parent=0
    _
  %s8 = ssub.s32 1, %s6
  %s9 = scalar_select 0, %s8, %s6
  $region1: #{tpu_custom_call.1} parent=0
    #allocation5 [shape = 'u8[8192]{0}', space=vmem, size = 0x2000, scoped, tag = 'input window, operand 0']
    #allocation6 [shape = 's32[2]{0}', space=sflag, size = 0x8, scoped, tag = 'scoped memory for tpu_custom_call.1']
    #allocation7 [shape = 'u8[2048]{0}', space=vmem, size = 0x800, scoped, tag = 'input window, operand 1']
    #allocation8 [shape = 's32[2]{0}', space=sflag, size = 0x8, scoped, tag = 'scoped memory for tpu_custom_call.1']
    %10 = vsyncpa [#allocation6], 0
    %s11 = scalar_lea.sflag [#allocation6], 1
    %12 = vsyncpa %s11, 0
    %13 = vsyncpa [#allocation8], 0
    %s14 = scalar_lea.sflag [#allocation8], 1
    %15 = vsyncpa %s14, 0
    loop: start=0, step=1, limit=4
    $region2: #{tpu_custom_call.1} parent=1 // loop_pre_header
      _
    $region3: #{tpu_custom_call.1} parent=1 // loop_header
      %s17 = sphi 0, %s21
      %p18 = scmp.ge.s32.totalorder %s17, 4
      %s24 = sphi 0, %s36
      %s25 = sphi 0, %s32
      %s26 = sphi 0, %s24
      %s27 = sphi 0, %s25
      %s28 = sphi 0, %s26
      %s29 = sphi 0, %s27
      %s41 = sphi 0, %s43
      %s44 = sphi 0, %s41
      %s45 = sphi 0, %s44
      %s61 = sphi 0, %s45
      %s69 = sphi 0, %s71
      %s72 = sphi 0, %s69
      %s73 = sphi 0, %s72
      %s89 = sphi 0, %s73
      %s95 = sphi 0, %s97
      %s98 = sphi 0, %s95
      %s99 = sphi 0, %s98
      %s115 = sphi 0, %s99
      %s121 = sphi 0, %s123
      %s124 = sphi 0, %s121
      %s125 = sphi 0, %s124
      %s141 = sphi 0, %s125
      %s147 = sphi 0, %s149
      %s150 = sphi 0, %s147
      %s151 = sphi 0, %s150
      %s167 = sphi 0, %s151
    $region4: #{tpu_custom_call.1} parent=1 // loop_header_branch
      %20 = sbr.rel (%p18) target = $region8
    $region5: #{tpu_custom_call.1} parent=1 // loop_body
      %s22 = ssub.s32 %s17, 1
      %s23 = ssub.s32 %s17, 2
      %s30 = sadd.s32 1, %s25
      %p31 = scmp.ge.s32.totalorder %s30, 1
      %s32 = scalar_select %p31, 0, %s30
      %s33 = sadd.s32 1, %s24
      %s34 = scalar_select %p31, %s33, %s24
      %p35 = scmp.ge.s32.totalorder %s34, 2
      %s36 = scalar_select %p35, 0, %s34
      %s37 = ssub.s32 %s24, %s36
      %s38 = ssub.s32 %s25, %s32
      %s39 = sor.u32 %s37, %s38
      %p40 = scmp.eq.s32.totalorder %s39, 0
      %s42 = sadd.s32 %s41, 1
      %s43 = scalar_select %p40, %s41, %s42
      %p46 = pneg %p40
      %p47 = scmp.eq.s32.totalorder %s17, 1
      %p48 = por %p46, %p47
      %p49 = scmp.ne.s32.totalorder %s41, %s44
      %p50 = scmp.eq.s32.totalorder %s17, 0
      %p51 = por %p49, %p50
      %p52 = scmp.ne.s32.totalorder %s41, %s44
      %p53 = scmp.eq.s32.totalorder %s22, 1
      %p54 = por %p52, %p53
      %p55 = scmp.ne.s32.totalorder %s44, %s45
      %p56 = scmp.eq.s32.totalorder %s22, 0
      %p57 = por %p55, %p56
      %p58 = scmp.ne.s32.totalorder %s44, %s45
      %p59 = scmp.eq.s32.totalorder %s23, 1
      %p60 = por %p58, %p59
      %p62 = scmp.ne.s32.totalorder %s45, %s61
      %p63 = scmp.eq.s32.totalorder %s23, 0
      %p64 = por %p62, %p63
      %s65 = ssub.s32 %s24, %s36
      %s66 = ssub.s32 %s25, %s32
      %s67 = sor.u32 %s65, %s66
      %p68 = scmp.eq.s32.totalorder %s67, 0
      %s70 = sadd.s32 %s69, 1
      %s71 = scalar_select %p68, %s69, %s70
      %p74 = pneg %p68
      %p75 = scmp.eq.s32.totalorder %s17, 1
      %p76 = por %p74, %p75
      %p77 = scmp.ne.s32.totalorder %s69, %s72
      %p78 = scmp.eq.s32.totalorder %s17, 0
      %p79 = por %p77, %p78
      %p80 = scmp.ne.s32.totalorder %s69, %s72
      %p81 = scmp.eq.s32.totalorder %s22, 1
      %p82 = por %p80, %p81
      %p83 = scmp.ne.s32.totalorder %s72, %s73
      %p84 = scmp.eq.s32.totalorder %s22, 0
      %p85 = por %p83, %p84
      %p86 = scmp.ne.s32.totalorder %s72, %s73
      %p87 = scmp.eq.s32.totalorder %s23, 1
      %p88 = por %p86, %p87
      %p90 = scmp.ne.s32.totalorder %s73, %s89
      %p91 = scmp.eq.s32.totalorder %s23, 0
      %p92 = por %p90, %p91
      %s93 = ssub.s32 %s24, %s36
      %p94 = scmp.eq.s32.totalorder %s93, 0
      %s96 = sadd.s32 %s95, 1
      %s97 = scalar_select %p94, %s95, %s96
      %p100 = pneg %p94
      %p101 = scmp.eq.s32.totalorder %s17, 1
      %p102 = por %p100, %p101
      %p103 = scmp.ne.s32.totalorder %s95, %s98
      %p104 = scmp.eq.s32.totalorder %s17, 0
      %p105 = por %p103, %p104
      %p106 = scmp.ne.s32.totalorder %s95, %s98
      %p107 = scmp.eq.s32.totalorder %s22, 1
      %p108 = por %p106, %p107
      %p109 = scmp.ne.s32.totalorder %s98, %s99
      %p110 = scmp.eq.s32.totalorder %s22, 0
      %p111 = por %p109, %p110
      %p112 = scmp.ne.s32.totalorder %s98, %s99
      %p113 = scmp.eq.s32.totalorder %s23, 1
      %p114 = por %p112, %p113
      %p116 = scmp.ne.s32.totalorder %s99, %s115
      %p117 = scmp.eq.s32.totalorder %s23, 0
      %p118 = por %p116, %p117
      %s119 = ssub.s32 %s24, %s36
      %p120 = scmp.eq.s32.totalorder %s119, 0
      %s122 = sadd.s32 %s121, 1
      %s123 = scalar_select %p120, %s121, %s122
      %p126 = pneg %p120
      %p127 = scmp.eq.s32.totalorder %s17, 1
      %p128 = por %p126, %p127
      %p129 = scmp.ne.s32.totalorder %s121, %s124
      %p130 = scmp.eq.s32.totalorder %s17, 0
      %p131 = por %p129, %p130
      %p132 = scmp.ne.s32.totalorder %s121, %s124
      %p133 = scmp.eq.s32.totalorder %s22, 1
      %p134 = por %p132, %p133
      %p135 = scmp.ne.s32.totalorder %s124, %s125
      %p136 = scmp.eq.s32.totalorder %s22, 0
      %p137 = por %p135, %p136
      %p138 = scmp.ne.s32.totalorder %s124, %s125
      %p139 = scmp.eq.s32.totalorder %s23, 1
      %p140 = por %p138, %p139
      %p142 = scmp.ne.s32.totalorder %s125, %s141
      %p143 = scmp.eq.s32.totalorder %s23, 0
      %p144 = por %p142, %p143
      %s145 = ssub.s32 %s24, %s36
      %p146 = scmp.eq.s32.totalorder %s145, 0
      %s148 = sadd.s32 %s147, 1
      %s149 = scalar_select %p146, %s147, %s148
      %p152 = pneg %p146
      %p153 = scmp.eq.s32.totalorder %s17, 1
      %p154 = por %p152, %p153
      %p155 = scmp.ne.s32.totalorder %s147, %s150
      %p156 = scmp.eq.s32.totalorder %s17, 0
      %p157 = por %p155, %p156
      %p158 = scmp.ne.s32.totalorder %s147, %s150
      %p159 = scmp.eq.s32.totalorder %s22, 1
      %p160 = por %p158, %p159
      %p161 = scmp.ne.s32.totalorder %s150, %s151
      %p162 = scmp.eq.s32.totalorder %s22, 0
      %p163 = por %p161, %p162
      %p164 = scmp.ne.s32.totalorder %s150, %s151
      %p165 = scmp.eq.s32.totalorder %s23, 1
      %p166 = por %p164, %p165
      %p168 = scmp.ne.s32.totalorder %s151, %s167
      %p169 = scmp.eq.s32.totalorder %s23, 0
      %p170 = por %p168, %p169
      %p171 = scmp.le.s32.totalorder 1, %s17
      %p172 = scmp.lt.s32.totalorder %s17, 3
      %p173 = pnand %p171, %p172
      %p174 = pneg %p173
      // Predicated region
      $region9: #{tpu_custom_call.1} parent=5 // pred_check
        _
      $region10: #{tpu_custom_call.1} parent=5 // pred_check_branch
        %176 = sbr.rel (%p173) target = $region12
      $region11: #{tpu_custom_call.1} parent=5 // pred_region
        %s177 = ssub.s32 %s17, 1
      $region12: #{tpu_custom_call.1} parent=5 // pred_fallthru
        _
      %p178 = scmp.lt.s32.totalorder %s17, 2
      // Predicated region
      $region13: #{tpu_custom_call.1} parent=5 // pred_check
        %p179 = pneg %p178
      $region14: #{tpu_custom_call.1} parent=5 // pred_check_branch
        %181 = sbr.rel (%p179) target = $region16
      $region15: #{tpu_custom_call.1} parent=5 // pred_region
        // Predicated region
        $region17: #{tpu_custom_call.1} parent=15 // pred_check
          %p182 = pneg %p51
        $region18: #{tpu_custom_call.1} parent=15 // pred_check_branch
          %184 = sbr.rel (%p182) target = $region20
        $region19: #{tpu_custom_call.1} parent=15 // pred_region
          %s185 = sand.u32 %s41, 1
          %s186 = scalar_lea.sflag [#allocation6], %s185
          %s187 = sand.u32 %s41, 1
          %s188 = smul.addr %s187, 8
          %s189 = scalar_lea.vmem [#allocation5], %s188
          %s190 = smul.u32 2, %s25
          %s192 = ssub.s32 128, 128
          %193 = vsyncadd %s186, %s192
          %s194 = smul.addr %s24, 2
          %s195 = sadd.s32 %s190, %s194
          %s196 = smul.addr %s195, 64
          %s197 = scalar_lea.hbm %s0, %s196
          %s199 = sshll.u32 %s189, 4
          %s200 = int_to_ptr.vmem [resolvable:$true] %s199
          %202 = dma.hbm_to_vmem [thread:$0]  %s197, 128, %s200, %s186
        $region20: #{tpu_custom_call.1} parent=15 // pred_fallthru
          _
        // Predicated region
        $region21: #{tpu_custom_call.1} parent=15 // pred_check
          %p203 = pneg %p79
        $region22: #{tpu_custom_call.1} parent=15 // pred_check_branch
          %205 = sbr.rel (%p203) target = $region24
        $region23: #{tpu_custom_call.1} parent=15 // pred_region
          %s206 = sand.u32 %s69, 1
          %s207 = scalar_lea.sflag [#allocation8], %s206
          %s208 = sand.u32 %s69, 1
          %s209 = smul.addr %s208, 2
          %s210 = scalar_lea.vmem [#allocation7], %s209
          %s211 = smul.u32 2, %s25
          %s213 = ssub.s32 32, 32
          %214 = vsyncadd %s207, %s213
          %s215 = smul.addr %s24, 2
          %s216 = sadd.s32 %s211, %s215
          %s217 = smul.addr %s216, 16
          %s218 = scalar_lea.hbm %s1, %s217
          %s220 = sshll.u32 %s210, 4
          %s221 = int_to_ptr.vmem [resolvable:$true] %s220
          %223 = dma.hbm_to_vmem [thread:$0]  %s218, 32, %s221, %s207
        $region24: #{tpu_custom_call.1} parent=15 // pred_fallthru
          _
      $region16: #{tpu_custom_call.1} parent=5 // pred_fallthru
        _
      %p224 = scmp.le.s32.totalorder 1, %s17
      %p225 = scmp.lt.s32.totalorder %s17, 3
      %p226 = pnand %p224, %p225
      %p227 = pneg %p226
      // Predicated region
      $region25: #{tpu_custom_call.1} parent=5 // pred_check
        _
      $region26: #{tpu_custom_call.1} parent=5 // pred_check_branch
        %229 = sbr.rel (%p226) target = $region28
      $region27: #{tpu_custom_call.1} parent=5 // pred_region
        %s230 = ssub.s32 %s17, 1
        %s231 = sand.u32 %s44, 1
        %s232 = scalar_lea.sflag [#allocation6], %s231
        %s233 = sand.u32 %s44, 1
        %s234 = smul.addr %s233, 8
        %s235 = scalar_lea.vmem [#allocation5], %s234
        // Predicated region
        $region29: #{tpu_custom_call.1} parent=27 // pred_check
          %p236 = pneg %p57
        $region30: #{tpu_custom_call.1} parent=27 // pred_check_branch
          %238 = sbr.rel (%p236) target = $region32
        $region31: #{tpu_custom_call.1} parent=27 // pred_region
          %239 = dma.done %s232, 128
        $region32: #{tpu_custom_call.1} parent=27 // pred_fallthru
          _
        %s240 = sand.u32 %s72, 1
        %s241 = scalar_lea.sflag [#allocation8], %s240
        %s242 = sand.u32 %s72, 1
        %s243 = smul.addr %s242, 2
        %s244 = scalar_lea.vmem [#allocation7], %s243
        // Predicated region
        $region33: #{tpu_custom_call.1} parent=27 // pred_check
          %p245 = pneg %p85
        $region34: #{tpu_custom_call.1} parent=27 // pred_check_branch
          %247 = sbr.rel (%p245) target = $region36
        $region35: #{tpu_custom_call.1} parent=27 // pred_region
          %248 = dma.done %s241, 32
        $region36: #{tpu_custom_call.1} parent=27 // pred_fallthru
          _
        %s249 = sand.u32 %s44, 1
        %s250 = scalar_lea.sflag [#allocation6], %s249
        %s251 = sand.u32 %s44, 1
        %s252 = smul.addr %s251, 8
        %s253 = scalar_lea.vmem [#allocation5], %s252
        %p254 = pneg %p57
        %p255 = pneg %p54
        %s256 = sand.u32 %s72, 1
        %s257 = scalar_lea.sflag [#allocation8], %s256
        %s258 = sand.u32 %s72, 1
        %s259 = smul.addr %s258, 2
        %s260 = scalar_lea.vmem [#allocation7], %s259
        %p261 = pneg %p85
        %p262 = pneg %p82
        %p263 = pneg %p111
        %p264 = pneg %p108
        %p265 = scmp.lt.s32.totalorder %s26, 1
        %s266 = scalar_select %p265, %s26, 1
        %s267 = smul.addr %s266, 4
        %s268 = scalar_lea.vmem %s2, %s267
        %p269 = pneg %p137
        %p270 = pneg %p134
        %p271 = scmp.lt.s32.totalorder %s26, 1
        %s272 = scalar_select %p271, %s26, 1
        %s273 = smul.addr %s272, 4
        %s274 = scalar_lea.vmem %s3, %s273
        %p275 = pneg %p163
        %p276 = pneg %p160
        %p277 = scmp.lt.s32.totalorder %s26, 1
        %s278 = scalar_select %p277, %s26, 1
        %s279 = smul.addr %s278, 4
        %s280 = scalar_lea.vmem %s4, %s279
        %s281 = smul.u32 2, %s27
        %s282 = smul.u32 2, %s27
        %p283 = scmp.lt.s32.totalorder %s26, 1
        %s284 = scalar_select %p283, %s26, 1
        %s285 = smul.addr %s284, 4
        %s286 = scalar_lea.vmem %s2, %s285
        %p287 = scmp.lt.s32.totalorder %s26, 1
        %s288 = scalar_select %p287, %s26, 1
        %s289 = smul.addr %s288, 4
        %s290 = scalar_lea.vmem %s3, %s289
        %p291 = scmp.lt.s32.totalorder %s26, 1
        %s292 = scalar_select %p291, %s26, 1
        %s293 = smul.addr %s292, 4
        %s294 = scalar_lea.vmem %s4, %s293
        %p295 = scmp.eq.s32.totalorder %s27, 0
        // Predicated region
        $region37: #{tpu_custom_call.1} parent=27 // pred_check
          %p296 = pneg %p295
        $region38: #{tpu_custom_call.1} parent=27 // pred_check_branch
          %298 = sbr.rel (%p296) target = $region40
        $region39: #{tpu_custom_call.1} parent=27 // pred_region
          %299 = vst [vmem:[#allocation2] sm:$0xff] 0.0
          %300 = vst [vmem:[#allocation3] sm:$0xff] 0.0
          %301 = vst [vmem:[#allocation4] sm:$0xff] 0.0
        $region40: #{tpu_custom_call.1} parent=27 // pred_fallthru
          _
        %v302 = vld [vmem:[%s235] sm:$0xff]
        %v303 = vld [vmem:[%s244] sm:$0x3]
        %v304 = vlaneseq
        %v305 = vshrl.u32 %v304, 7
        %v306 = vlaneseq
        %v307 = vshrl.u32 %v306, 7
        %v308 = vsub.s32 0, %v307
        %v309 = vrot.slane %v303, %v308
        %v310 = vlaneseq
        %v311 = vshrl.u32 %v310, 7
        %v312 = vsub.s32 1, %v311
        %v313 = vrot.slane %v303, %v312
        %vm314 = vcmp.eq.s32.totalorder %v309, %v305
        %vm315 = vcmp.eq.s32.totalorder %v313, %v305
        %v316 = vld [vmem:[#allocation2] sm:$0xff]
        %v318 = vcombine.high %v302, %v302
        %v320 = vsel %vm314, %v302, 0.0
        %v321 = vsel %vm315, %v318, 0.0
        %v324 = vcombine.low %v320, %v321
        %v326 = vadd.f32 %v316, %v324
        %327 = vst [vmem:[#allocation2] sm:$0xff] %v326
        %v328 = vld [vmem:[#allocation3] sm:$0xff]
        %v329 = vsel %vm314, 1, 0
        %v330 = vsel %vm315, 1, 0
        %v331 = vcvt.s32.f32 %v329
        %v332 = vcvt.s32.f32 %v330
        %v335 = vcombine.low %v331, %v332
        %v337 = vadd.f32 %v328, %v335
        %338 = vst [vmem:[#allocation3] sm:$0xff] %v337
        %v339 = vmul.f32 %v302, %v302
        %v340 = vld [vmem:[#allocation4] sm:$0xff]
        %v341 = vadd.f32 %v340, %v339
        %342 = vst [vmem:[#allocation4] sm:$0xff] %v341
        // Predicated region
        $region41: #{tpu_custom_call.1} parent=27 // pred_check
          %p343 = pneg %p295
        $region42: #{tpu_custom_call.1} parent=27 // pred_check_branch
          %345 = sbr.rel (%p343) target = $region44
        $region43: #{tpu_custom_call.1} parent=27 // pred_region
          %v346 = vld [vmem:[#allocation2] sm:$0xff]
          %v348 = vcombine.high %v346, %v346
          %vm350 = vcmask 1043456
          %v351 = vsel %vm350, %v346, 0.0
          %v352 = vsel %vm350, %v348, 0.0
          %v353 = vadd.f32 %v351, %v352
          %354 = vadd.xlane.f32.xlu0 %v353
          %v355 = vpop.xlane.xlu0 %354
          %vm356 = vcmask 3072
          %357 = vst.msk [vmem:[%s286] sm:$0xf] %vm356, %v355
          %v358 = vld [vmem:[#allocation3] sm:$0xff]
          %v360 = vcombine.high %v358, %v358
          %v362 = vsel %vm350, %v358, 0.0
          %v363 = vsel %vm350, %v360, 0.0
          %v364 = vadd.f32 %v362, %v363
          %365 = vadd.xlane.f32.xlu0 %v364
          %v366 = vpop.xlane.xlu0 %365
          %367 = vst.msk [vmem:[%s290] sm:$0xf] %vm356, %v366
          %v368 = vld [vmem:[#allocation4] sm:$0xff]
          %v370 = vcombine.high %v368, %v368
          %v372 = vsel %vm350, %v368, 0.0
          %v373 = vsel %vm350, %v370, 0.0
          %v374 = vadd.f32 %v372, %v373
          %375 = vadd.xlane.f32.xlu0 %v374
          %v376 = vpop.xlane.xlu0 %375
          %377 = vst.msk [vmem:[%s294] sm:$0xf] %vm356, %v376
        $region44: #{tpu_custom_call.1} parent=27 // pred_fallthru
          _
        %p378 = scmp.lt.s32.totalorder %s26, 1
        %s379 = scalar_select %p378, %s26, 1
        %s380 = smul.addr %s379, 4
        %s381 = scalar_lea.vmem %s2, %s380
        %p382 = scmp.lt.s32.totalorder %s26, 1
        %s383 = scalar_select %p382, %s26, 1
        %s384 = smul.addr %s383, 4
        %s385 = scalar_lea.vmem %s3, %s384
        %p386 = scmp.lt.s32.totalorder %s26, 1
        %s387 = scalar_select %p386, %s26, 1
        %s388 = smul.addr %s387, 4
        %s389 = scalar_lea.vmem %s4, %s388
        // Predicated region
        $region45: #{tpu_custom_call.1} parent=27 // pred_check
          %p390 = pneg %p108
        $region46: #{tpu_custom_call.1} parent=27 // pred_check_branch
          %392 = sbr.rel (%p390) target = $region48
        $region47: #{tpu_custom_call.1} parent=27 // pred_region
          _
        $region48: #{tpu_custom_call.1} parent=27 // pred_fallthru
          _
        // Predicated region
        $region49: #{tpu_custom_call.1} parent=27 // pred_check
          %p393 = pneg %p134
        $region50: #{tpu_custom_call.1} parent=27 // pred_check_branch
          %395 = sbr.rel (%p393) target = $region52
        $region51: #{tpu_custom_call.1} parent=27 // pred_region
          _
        $region52: #{tpu_custom_call.1} parent=27 // pred_fallthru
          _
        // Predicated region
        $region53: #{tpu_custom_call.1} parent=27 // pred_check
          %p396 = pneg %p160
        $region54: #{tpu_custom_call.1} parent=27 // pred_check_branch
          %398 = sbr.rel (%p396) target = $region56
        $region55: #{tpu_custom_call.1} parent=27 // pred_region
          _
        $region56: #{tpu_custom_call.1} parent=27 // pred_fallthru
          _
      $region28: #{tpu_custom_call.1} parent=5 // pred_fallthru
        _
      %p399 = scmp.le.s32.totalorder 2, %s17
      // Predicated region
      $region57: #{tpu_custom_call.1} parent=5 // pred_check
        %p400 = pneg %p399
      $region58: #{tpu_custom_call.1} parent=5 // pred_check_branch
        %402 = sbr.rel (%p400) target = $region60
      $region59: #{tpu_custom_call.1} parent=5 // pred_region
        %s403 = ssub.s32 %s17, 2
        // Predicated region
        $region61: #{tpu_custom_call.1} parent=59 // pred_check
          %p404 = pneg %p114
        $region62: #{tpu_custom_call.1} parent=59 // pred_check_branch
          %406 = sbr.rel (%p404) target = $region64
        $region63: #{tpu_custom_call.1} parent=59 // pred_region
          %p407 = scmp.lt.s32.totalorder %s28, 1
          %s408 = scalar_select %p407, %s28, 1
          %s409 = smul.addr %s408, 4
          %s410 = scalar_lea.vmem %s2, %s409
        $region64: #{tpu_custom_call.1} parent=59 // pred_fallthru
          _
        // Predicated region
        $region65: #{tpu_custom_call.1} parent=59 // pred_check
          %p411 = pneg %p140
        $region66: #{tpu_custom_call.1} parent=59 // pred_check_branch
          %413 = sbr.rel (%p411) target = $region68
        $region67: #{tpu_custom_call.1} parent=59 // pred_region
          %p414 = scmp.lt.s32.totalorder %s28, 1
          %s415 = scalar_select %p414, %s28, 1
          %s416 = smul.addr %s415, 4
          %s417 = scalar_lea.vmem %s3, %s416
        $region68: #{tpu_custom_call.1} parent=59 // pred_fallthru
          _
        // Predicated region
        $region69: #{tpu_custom_call.1} parent=59 // pred_check
          %p418 = pneg %p166
        $region70: #{tpu_custom_call.1} parent=59 // pred_check_branch
          %420 = sbr.rel (%p418) target = $region72
        $region71: #{tpu_custom_call.1} parent=59 // pred_region
          %p421 = scmp.lt.s32.totalorder %s28, 1
          %s422 = scalar_select %p421, %s28, 1
          %s423 = smul.addr %s422, 4
          %s424 = scalar_lea.vmem %s4, %s423
        $region72: #{tpu_custom_call.1} parent=59 // pred_fallthru
          _
      $region60: #{tpu_custom_call.1} parent=5 // pred_fallthru
        _
    $region6: #{tpu_custom_call.1} parent=1 // loop_footer
      %s21 = sadd.s32 1, %s17
    $region7: #{tpu_custom_call.1} parent=1 // loop_footer_branch
      %16 = sbr.rel target = $region3
    $region8: #{tpu_custom_call.1} parent=1 // loop_exit
      _
    %425 = vsyncpa [#allocation6], 1
    %s426 = scalar_lea.sflag [#allocation6], 1
    %427 = vsyncpa %s426, 1
    %428 = vsyncpa [#allocation8], 1
    %s429 = scalar_lea.sflag [#allocation8], 1
    %430 = vsyncpa %s429, 1

</llo_original>
